<compile_context>
chip_gen: v7x
topology: tpu7x:2x2x1
jax: 0.10.0
libtpu: 0.0.40
codegen_flags: <defaults>
</compile_context>

<pallas_src>
import jax
import jax.numpy as jnp
from jax.experimental import pallas as pl
from jax.experimental.pallas import tpu as pltpu

LANE = 128
MAX_TILE_ROWS = 1024  # 1024 * 128 * 4 B = 512 KiB per f32 buffer per tile


def _round_up(x, m):
    return (x + m - 1) // m * m


def _proposal_kernel(scale_ref, z_ref, eps_ref, out_ref):
    """out = eps * scale + z  (f32 math on the VPU, cast on the store)."""
    s = scale_ref[0]
    z = z_ref[...].astype(jnp.float32)
    eps = eps_ref[...].astype(jnp.float32)
    out_ref[...] = (eps * s + z).astype(out_ref.dtype)


def diag_gaussian_proposal_forward(z, scale, key):
    """JAX/Pallas equivalent of DiagGaussianProposal.forward.

    Args:
      z:     array of shape (num_samples,) + shape  (float dtype)
      scale: proposal std-dev (python float / scalar)
      key:   jax.random key for the proposal noise (vary it per call)

    Returns:
      (z_new, log_p_diff) with z_new.shape == z.shape, log_p_diff.shape == (N,)
    """
    N = z.shape[0]
    total = z.size

    # Lane/sublane-dense slab: flatten everything onto width-128 rows.
    rows = pl.cdiv(total, LANE)
    tile_r = MAX_TILE_ROWS if rows >= MAX_TILE_ROWS else _round_up(rows, 8)
    rows_pad = _round_up(rows, tile_r)
    padded = rows_pad * LANE

    z_flat = z.reshape(-1)
    if padded != total:
        z_flat = jnp.pad(z_flat, (0, padded - total))
    z2 = z_flat.reshape(rows_pad, LANE)

    # TODO(synk): generate eps on-chip via pltpu.prng_seed/stateful_normal to
    # drop the eps HBM stream; those primitives do not lower in the sandbox
    # interpreter, so the noise is produced here and streamed into the kernel.
    eps2 = jax.random.normal(key, (rows_pad, LANE), dtype=jnp.float32)

    scale_arr = jnp.asarray([scale], dtype=jnp.float32)

    grid = (rows_pad // tile_r,)
    z_new2 = pl.pallas_call(
        _proposal_kernel,
        out_shape=jax.ShapeDtypeStruct((rows_pad, LANE), z.dtype),
        grid=grid,
        in_specs=[
            pl.BlockSpec(memory_space=pltpu.MemorySpace.SMEM),   # scale (scalar)
            pl.BlockSpec((tile_r, LANE), lambda i: (i, 0)),      # z tile
            pl.BlockSpec((tile_r, LANE), lambda i: (i, 0)),      # eps tile
        ],
        out_specs=pl.BlockSpec((tile_r, LANE), lambda i: (i, 0)),
        compiler_params=pltpu.CompilerParams(
            dimension_semantics=("parallel",),  # shard tiles across TCs on v7x
        ),
    )(scale_arr, z2, eps2)

    z_new = z_new2.reshape(-1)[:total].reshape(z.shape)

    # Symmetric proposal: log p(z|z_) - log p(z_|z) == 0 identically.
    log_p_diff = jnp.zeros((N,), dtype=z.dtype)
    return z_new, log_p_diff


if __name__ == "__main__":
    # Module config: shape of the sampled variable and proposal std-dev.
    var_shape = (4, 16, 16)   # self.shape
    scale = 0.1               # self.scale
    batch = 2

    key = jax.random.PRNGKey(0)
    k_z, k_eps = jax.random.split(key)
    z = jax.random.normal(k_z, (batch,) + var_shape, dtype=jnp.float32)

    z_new, log_p_diff = diag_gaussian_proposal_forward(z, scale, k_eps)
    jax.block_until_ready((z_new, log_p_diff))

    # Sanity checks: shapes/dtypes, zero log-prob difference, and that the
    # injected proposal noise has roughly unit std after dividing by scale.
    assert z_new.shape == z.shape and z_new.dtype == z.dtype
    assert log_p_diff.shape == (batch,) and log_p_diff.dtype == z.dtype
    assert bool(jnp.all(log_p_diff == 0.0))
    diff = (z_new - z) / scale
    assert float(jnp.abs(jnp.mean(diff))) < 0.2          # ~N(0,1) noise
    assert 0.7 < float(jnp.std(diff)) < 1.3

    print("KERNEL_OK")
</pallas_src>

<mosaic_0001>
module attributes {stable_mosaic.version = 11 : i64} {
  func.func @_proposal_kernel(%arg0: i32, %arg1: memref<1xf32, #tpu.memory_space<smem>>, %arg2: memref<16x128xf32, #tpu.memory_space<vmem>>, %arg3: memref<16x128xf32, #tpu.memory_space<vmem>>, %arg4: memref<16x128xf32, #tpu.memory_space<vmem>>) attributes {dimension_semantics = [#tpu.dimension_semantics<parallel>], iteration_bounds = array<i64: 1>, scalar_prefetch = 0 : i64, scratch_operands = 0 : i64, tpu.core_type = #tpu.core_type<tc>, window_params = [{transform_indices = @transform_0, window_bounds = array<i64: 1>}, {transform_indices = @transform_1, window_bounds = array<i64: 16, 128>}, {transform_indices = @transform_2, window_bounds = array<i64: 16, 128>}, {transform_indices = @transform_3, window_bounds = array<i64: 16, 128>}]} {
    %c0 = arith.constant 0 : index
    %0 = memref.load %arg1[%c0] : memref<1xf32, #tpu.memory_space<smem>>
    %c0_0 = arith.constant 0 : index
    %c0_1 = arith.constant 0 : index
    %1 = vector.load %arg2[%c0_0, %c0_1] : memref<16x128xf32, #tpu.memory_space<vmem>>, vector<16x128xf32>
    %c0_2 = arith.constant 0 : index
    %c0_3 = arith.constant 0 : index
    %2 = vector.load %arg3[%c0_2, %c0_3] : memref<16x128xf32, #tpu.memory_space<vmem>>, vector<16x128xf32>
    %3 = vector.broadcast %0 : f32 to vector<16x128xf32>
    %4 = arith.mulf %2, %3 : vector<16x128xf32>
    %5 = arith.addf %4, %1 : vector<16x128xf32>
    %c0_4 = arith.constant 0 : index
    %c0_5 = arith.constant 0 : index
    %6 = vector.load %arg4[%c0_4, %c0_5] : memref<16x128xf32, #tpu.memory_space<vmem>>, vector<16x128xf32>
    tpu.vector_store %arg4[%c0_4, %c0_5], %5 {strides = array<i32>} : memref<16x128xf32, #tpu.memory_space<vmem>>, vector<16x128xf32>,
    return
  }
  func.func @transform_0(%arg0: i32) -> i32 {
    %c0_i32 = arith.constant 0 : i32
    %c0_i32_0 = arith.constant 0 : i32
    return %c0_i32 : i32
  }
  func.func @transform_1(%arg0: i32) -> (i32, i32) {
    %c0_i32 = arith.constant 0 : i32
    %c0_i32_0 = arith.constant 0 : i32
    return %arg0, %c0_i32 : i32, i32
  }
  func.func @transform_2(%arg0: i32) -> (i32, i32) {
    %c0_i32 = arith.constant 0 : i32
    %c0_i32_0 = arith.constant 0 : i32
    return %arg0, %c0_i32 : i32, i32
  }
  func.func @transform_3(%arg0: i32) -> (i32, i32) {
    %c0_i32 = arith.constant 0 : i32
    %c0_i32_0 = arith.constant 0 : i32
    return %arg0, %c0_i32 : i32, i32
  }
}

</mosaic_0001>

<llo_original>
// kernel: tpu_custom_call.1
$region0: #{tpu_custom_call.1}
  #allocation0 [shape = 'u32[]', space=smem, size = 0x4, offset = 0x4, fixed_abs, tag = 'smem constant byte address 0x4 - core index']
  #allocation1 [shape = 'u32[144,128]{1,0:T(1,128)}', space=vmem, size = 0x12000, scoped, tag = 'internal scratch']
  #allocation2 [shape = 'f32[1]{0:T(128)S(6)}', space=smem, size = 0x200, scoped, tag = 'scoped memory for tpu_custom_call.1']
  %s0 = inlined_call_operand.<no memory space> [shape: f32[1], index: 0, kind: input, shape index: {}]
  %s1 = inlined_call_operand.hbm [shape: f32[16,128], index: 1, kind: input, shape index: {}]
  %s2 = inlined_call_operand.hbm [shape: f32[16,128], index: 2, kind: input, shape index: {}]
  %s3 = inlined_call_operand.hbm [shape: f32[16,128], index: 3, kind: output, shape index: {}]
  %s4 = sld [smem:[#allocation0]]
  $region30: #{tpu_custom_call.1} parent=0
    _
  %s6 = ssub.s32 1, %s4
  %s7 = scalar_select 0, %s6, %s4
  %8 = sst [smem:[#allocation2]] %s0
  $region1: #{tpu_custom_call.1} parent=0
    #allocation3 [shape = 'u8[8192]{0}', space=vmem, size = 0x2000, scoped, tag = 'input window, operand 1, single buffered']
    #allocation4 [shape = 's32[1]{0}', space=sflag, size = 0x4, scoped, tag = 'scoped memory for tpu_custom_call.1']
    #allocation5 [shape = 's32[1]{0}', space=sflag, size = 0x4, scoped, tag = 'scoped memory for tpu_custom_call.1']
    #allocation6 [shape = 'u8[8192]{0}', space=vmem, size = 0x2000, scoped, tag = 'input window, operand 2, single buffered']
    #allocation7 [shape = 's32[1]{0}', space=sflag, size = 0x4, scoped, tag = 'scoped memory for tpu_custom_call.1']
    #allocation8 [shape = 'u8[8192]{0}', space=vmem, size = 0x2000, scoped, tag = 'output window, operand 0, single buffered']
    %9 = vsyncpa [#allocation4], 0
    %10 = vsyncpa [#allocation7], 0
    %11 = vsyncpa [#allocation5], 0
    // Predicated region
    $region2: #{tpu_custom_call.1} parent=1 // pred_check
      _
    $region3: #{tpu_custom_call.1} parent=1 // pred_check_branch
      %13 = sbr.rel (0) target = $region5
    $region4: #{tpu_custom_call.1} parent=1 // pred_region
      _
    $region5: #{tpu_custom_call.1} parent=1 // pred_fallthru
      _
    // Predicated region
    $region6: #{tpu_custom_call.1} parent=1 // pred_check
      _
    $region7: #{tpu_custom_call.1} parent=1 // pred_check_branch
      %15 = sbr.rel (0) target = $region9
    $region8: #{tpu_custom_call.1} parent=1 // pred_region
      %s17 = ssub.s32 256, 256
      %18 = vsyncadd [#allocation4], %s17
      %s19 = sshll.u32 [#allocation3], 4
      %s20 = int_to_ptr.vmem [resolvable:$true] %s19
      %25 = dma.hbm_to_vmem [thread:$0]  %s1, 256, %s20, [#allocation4], 128, 128, 8
    $region9: #{tpu_custom_call.1} parent=1 // pred_fallthru
      _
    // Predicated region
    $region10: #{tpu_custom_call.1} parent=1 // pred_check
      _
    $region11: #{tpu_custom_call.1} parent=1 // pred_check_branch
      %27 = sbr.rel (0) target = $region13
    $region12: #{tpu_custom_call.1} parent=1 // pred_region
      %s29 = ssub.s32 256, 256
      %30 = vsyncadd [#allocation7], %s29
      %s31 = sshll.u32 [#allocation6], 4
      %s32 = int_to_ptr.vmem [resolvable:$true] %s31
      %37 = dma.hbm_to_vmem [thread:$0]  %s2, 256, %s32, [#allocation7], 128, 128, 8
    $region13: #{tpu_custom_call.1} parent=1 // pred_fallthru
      _
    // Predicated region
    $region14: #{tpu_custom_call.1} parent=1 // pred_check
      _
    $region15: #{tpu_custom_call.1} parent=1 // pred_check_branch
      %39 = sbr.rel (0) target = $region17
    $region16: #{tpu_custom_call.1} parent=1 // pred_region
      %40 = dma.done [#allocation4], 256
    $region17: #{tpu_custom_call.1} parent=1 // pred_fallthru
      _
    // Predicated region
    $region18: #{tpu_custom_call.1} parent=1 // pred_check
      _
    $region19: #{tpu_custom_call.1} parent=1 // pred_check_branch
      %42 = sbr.rel (0) target = $region21
    $region20: #{tpu_custom_call.1} parent=1 // pred_region
      %43 = dma.done [#allocation7], 256
    $region21: #{tpu_custom_call.1} parent=1 // pred_fallthru
      _
    %s44 = sld [smem:[#allocation2]]
    %v45 = vld [vmem:[#allocation3] sm:$0xff]
    %v46 = vld [vmem:[#allocation3 + $0x8] sm:$0xff]
    %v47 = vld [vmem:[#allocation6] sm:$0xff]
    %v48 = vld [vmem:[#allocation6 + $0x8] sm:$0xff]
    %v49 = vstv %s44
    %v50 = vmul.f32 %v47, %v49
    %v51 = vmul.f32 %v48, %v49
    %v52 = vadd.f32 %v50, %v45
    %v53 = vadd.f32 %v51, %v46
    %54 = vst [vmem:[#allocation8] sm:$0xff] %v52
    %55 = vst [vmem:[#allocation8 + $0x8] sm:$0xff] %v53
    // Predicated region
    $region22: #{tpu_custom_call.1} parent=1 // pred_check
      _
    $region23: #{tpu_custom_call.1} parent=1 // pred_check_branch
      %57 = sbr.rel (0) target = $region25
    $region24: #{tpu_custom_call.1} parent=1 // pred_region
      %s59 = ssub.s32 256, 256
      %60 = vsyncadd [#allocation5], %s59
      %s61 = sshll.u32 [#allocation8], 4
      %s62 = int_to_ptr.vmem [resolvable:$true] %s61
      %67 = dma.vmem_to_hbm [thread:$0]  %s62, 256, %s3, [#allocation5], 128, 128, 8
    $region25: #{tpu_custom_call.1} parent=1 // pred_fallthru
      _
    // Predicated region
    $region26: #{tpu_custom_call.1} parent=1 // pred_check
      _
    $region27: #{tpu_custom_call.1} parent=1 // pred_check_branch
      %69 = sbr.rel (0) target = $region29
    $region28: #{tpu_custom_call.1} parent=1 // pred_region
      %70 = dma.done [#allocation5], 256
    $region29: #{tpu_custom_call.1} parent=1 // pred_fallthru
      _
    %71 = vsyncpa [#allocation4], 1
    %72 = vsyncpa [#allocation7], 1
    %73 = vsyncpa [#allocation5], 1

</llo_original>
